<compile_context>
chip_gen: v7x
topology: tpu7x:2x2x1
jax: 0.10.0
libtpu: 0.0.40
codegen_flags: <defaults>
</compile_context>

<pallas_src>
import functools

import jax
import jax.numpy as jnp
from jax.experimental import pallas as pl
from jax.experimental.pallas import tpu as pltpu


def _round_up(x, m):
    return (x + m - 1) // m * m


def _conv_bn_relu_kernel(x_ref, w_ref, scale_ref, shift_ref, o_ref, *,
                         kh_sz, stride, tr, owp, oc, act):
    # x_ref:     (1, HP, OWP, KW*C)   W-packed padded image (bf16); resident across row tiles
    # w_ref:     (KH, KW*C, OC_pad)   raw conv weights (bf16), KW folded into the K dim
    # scale_ref: (1, OC_pad)          BN scale (f32), applied in f32 epilogue
    # shift_ref: (1, OC_pad)          BN shift (f32)
    # o_ref:     (1, TR*OWP, OC)      output tile (f32), unpadded OC
    r = pl.program_id(1)
    row0 = r * tr * stride
    kwc = x_ref.shape[3]
    m = tr * owp

    acc = None
    for i in range(kh_sz):
        if stride == 1:
            rows = x_ref[0, pl.ds(row0 + i, tr), :, :]
        else:
            rows = x_ref[0, pl.ds(row0 + i, tr, stride=stride), :, :]
        slab = rows.reshape(m, kwc)                                   # (tr*OWP, KW*C)
        part = jnp.dot(slab, w_ref[i], preferred_element_type=jnp.float32)
        acc = part if acc is None else acc + part                     # KH accumulator passes only

    y = acc * scale_ref[...] + shift_ref[...]
    if act:
        y = jnp.maximum(y, 0.0)
    o_ref[0] = y[:, :oc].astype(o_ref.dtype)


def conv2d_ba(x, weight, bn_gamma=None, bn_beta=None, bn_mean=None, bn_var=None,
              *, stride=1, padding=1, bias=None, bn=True, act=True, eps=1e-8):
    """Forward of Conv2dBA. x: (N, C, H, W) f32, weight: (OC, C, KH, KW) f32. Returns NCHW f32."""
    n, c, h, w = x.shape
    oc, wc, kh, kw = weight.shape
    assert wc == c

    oh = (h + 2 * padding - kh) // stride + 1
    ow = (w + 2 * padding - kw) // stride + 1

    # MXU N dim: 128 granularity, aim for 256-wide tiles when OC > 128 (v6e/v7x 2x256 MXU).
    oc_pad = _round_up(oc, 256) if oc > 128 else 128

    # --- eval-mode BN as per-channel scale/shift (scale stays f32, applied in-kernel) ---
    if bn:
        scale = bn_gamma.astype(jnp.float32) / jnp.sqrt(bn_var.astype(jnp.float32) + eps)
        shift = bn_beta.astype(jnp.float32) - bn_mean.astype(jnp.float32) * scale
    else:
        scale = jnp.ones((oc,), jnp.float32)
        shift = jnp.zeros((oc,), jnp.float32)
    if bias is not None:
        shift = shift + bias.astype(jnp.float32) * scale

    # Weights: (OC,C,KH,KW) -> (KH, KW*C, OC_pad) bf16 (no BN-scale folding).
    w_f = jnp.transpose(weight.astype(jnp.float32), (2, 3, 1, 0)).reshape(kh, kw * c, oc)
    w_f = jnp.pad(w_f, ((0, 0), (0, 0), (0, oc_pad - oc))).astype(jnp.bfloat16)
    scale_p = jnp.pad(scale, (0, oc_pad - oc)).reshape(1, oc_pad).astype(jnp.float32)
    shift_p = jnp.pad(shift, (0, oc_pad - oc)).reshape(1, oc_pad).astype(jnp.float32)

    # --- row-tile selection (tr output rows per grid step; tr*OWP matmul rows) ---
    owp = _round_up(ow, 8)          # sublane-aligned so the in-kernel merge is layout-free
    kwc = kw * c
    lane = 128
    per_row_bytes = owp * (_round_up(oc, lane) * 4 * 2     # double-buffered output VMEM tile (lane padded)
                           + oc_pad * 4                    # f32 accumulator
                           + max(kwc, lane) * 2)           # bf16 slab temp
    tile_budget = 8 * 1024 * 1024
    tr = min(oh, max(1, 2048 // owp), max(1, tile_budget // per_row_bytes))
    r_steps = -(-oh // tr)
    oh_pad = r_steps * tr

    # --- pad input (conv padding + extra for padded OH/OW), NHWC bf16 ---
    hp_needed = (oh_pad - 1) * stride + kh
    wp_needed = (owp - 1) * stride + kw
    pad_h_hi = max(padding, hp_needed - h - padding)
    pad_w_hi = max(padding, wp_needed - w - padding)
    x_nhwc = jnp.transpose(x, (0, 2, 3, 1)).astype(jnp.bfloat16)
    xp = jnp.pad(x_nhwc, ((0, 0), (padding, pad_h_hi), (padding, pad_w_hi), (0, 0)))
    hp = xp.shape[1]

    # --- W-fold (im2col along W only): xw[n,h,q, j*C+c] = xp[n, h, q*stride+j, c] ---
    cols = (owp - 1) * stride + 1
    taps = [xp[:, :, j:j + cols:stride, :] for j in range(kw)]        # each (N, HP, OWP, C)
    xw = jnp.stack(taps, axis=3).reshape(n, hp, owp, kwc)             # (N, HP, OWP, KW*C)

    # --- cost estimate ---
    flops = 2 * n * oh * ow * kh * kw * c * oc
    bytes_accessed = (xw.size * 2 + w_f.size * 2 + (scale_p.size + shift_p.size) * 4
                      + n * oh_pad * owp * oc * 4)
    cost = pl.CostEstimate(flops=flops, transcendentals=0, bytes_accessed=bytes_accessed)

    # --- VMEM footprint (with lane/sublane padding of narrow minor dims) + generation-aware cap ---
    img_vmem = 2 * hp * _round_up(owp, 16) * max(kwc, lane) * 2
    w_vmem = 2 * kh * _round_up(kwc, 16) * oc_pad * 2
    vec_vmem = 2 * 2 * 8 * oc_pad * 4
    out_vmem = 2 * tr * owp * _round_up(oc, lane) * 4
    tmp_vmem = tr * owp * oc_pad * 4 + tr * owp * max(kwc, lane) * 2
    footprint = img_vmem + w_vmem + vec_vmem + out_vmem + tmp_vmem

    try:
        vmem_cap = int(pltpu.get_tpu_info().vmem_capacity_bytes)   # 64 MiB (v7x) / 128 MiB (v5e/v6e)
    except Exception:
        vmem_cap = 64 * 1024 * 1024
    vmem_limit = int(min(max(vmem_cap - 16 * 1024 * 1024, 16 * 1024 * 1024),
                         max(32 * 1024 * 1024, footprint * 3 // 2)))

    kernel = functools.partial(_conv_bn_relu_kernel, kh_sz=kh, stride=stride,
                               tr=tr, owp=owp, oc=oc, act=act)

    out_flat = pl.pallas_call(
        kernel,
        out_shape=jax.ShapeDtypeStruct((n, oh_pad * owp, oc), jnp.float32),
        grid_spec=pltpu.PrefetchScalarGridSpec(
            num_scalar_prefetch=0,
            grid=(n, r_steps),
            in_specs=[
                # packed image: constant block index over r -> stays VMEM-resident per image
                pl.BlockSpec((1, hp, owp, kwc), lambda b, r: (b, 0, 0, 0)),
                pl.BlockSpec((kh, kwc, oc_pad), lambda b, r: (0, 0, 0)),   # weights
                pl.BlockSpec((1, oc_pad), lambda b, r: (0, 0)),            # BN scale
                pl.BlockSpec((1, oc_pad), lambda b, r: (0, 0)),            # BN shift
            ],
            out_specs=pl.BlockSpec((1, tr * owp, oc), lambda b, r: (b, r, 0)),
        ),
        compiler_params=pltpu.CompilerParams(
            dimension_semantics=("parallel", "parallel"),
            vmem_limit_bytes=vmem_limit),
        cost_estimate=cost,
    )(xw, w_f, scale_p, shift_p)

    out = out_flat.reshape(n, oh_pad, owp, oc)[:, :oh, :ow, :]
    # NHWC -> NCHW to match the PyTorch module's output layout.
    # TODO(synk): skip this transpose if the downstream consumer accepts NHWC.
    return jnp.transpose(out, (0, 3, 1, 2))


def _reference(x, weight, gamma, beta, mean, var, *, stride, padding, bn, act, eps=1e-8):
    y = jax.lax.conv_general_dilated(
        x, weight, window_strides=(stride, stride),
        padding=[(padding, padding), (padding, padding)],
        dimension_numbers=("NCHW", "OIHW", "NCHW"))
    if bn:
        y = (y - mean[None, :, None, None]) / jnp.sqrt(var[None, :, None, None] + eps)
        y = y * gamma[None, :, None, None] + beta[None, :, None, None]
    if act:
        y = jnp.maximum(y, 0.0)
    return y


if __name__ == "__main__":
    # Conv2dBA(in_channels=4, out_channels=8, kernel_size=3, stride=1, padding=1,
    #          bias=False, bn=True, act=True)
    N, C, H, W = 2, 4, 16, 16
    OC, KH, KW = 8, 3, 3
    stride, padding = 1, 1

    key = jax.random.PRNGKey(0)
    kx, kw_, kg, kb, km, kv = jax.random.split(key, 6)
    x = jax.random.normal(kx, (N, C, H, W), jnp.float32)
    weight = jax.random.normal(kw_, (OC, C, KH, KW), jnp.float32) * 0.1
    gamma = jax.random.normal(kg, (OC,), jnp.float32) * 0.1 + 1.0
    beta = jax.random.normal(kb, (OC,), jnp.float32) * 0.1
    mean = jax.random.normal(km, (OC,), jnp.float32) * 0.1
    var = jax.nn.softplus(jax.random.normal(kv, (OC,), jnp.float32)) + 0.5

    out = conv2d_ba(x, weight, gamma, beta, mean, var,
                    stride=stride, padding=padding, bn=True, act=True)
    out = jax.block_until_ready(out)

    ref = _reference(x, weight, gamma, beta, mean, var,
                     stride=stride, padding=padding, bn=True, act=True)
    assert out.shape == (N, OC, H, W), out.shape
    # bf16 MXU inputs (f32 accumulation, f32 BN epilogue) -> loosened tolerance vs pure-f32 reference.
    max_err = float(jnp.max(jnp.abs(out - ref)))
    assert max_err < 5e-2, max_err
    print("KERNEL_OK")
</pallas_src>

<mosaic_0001>
module attributes {stable_mosaic.version = 11 : i64} {
  func.func @_conv_bn_relu_kernel(%arg0: i32, %arg1: i32, %arg2: memref<1x18x16x12xbf16, #tpu.memory_space<vmem>>, %arg3: memref<3x12x128xbf16, #tpu.memory_space<vmem>>, %arg4: memref<1x128xf32, #tpu.memory_space<vmem>>, %arg5: memref<1x128xf32, #tpu.memory_space<vmem>>, %arg6: memref<1x256x8xf32, #tpu.memory_space<vmem>>) attributes {dimension_semantics = [#tpu.dimension_semantics<parallel>, #tpu.dimension_semantics<parallel>], iteration_bounds = array<i64: 2, 1>, scalar_prefetch = 0 : i64, scratch_operands = 0 : i64, tpu.core_type = #tpu.core_type<tc>, window_params = [{transform_indices = @transform_0, window_bounds = array<i64: 1, 18, 16, 12>}, {pipeline_mode = #tpu.pipeline_mode<synchronous>, transform_indices = @transform_1, window_bounds = array<i64: 3, 12, 128>}, {pipeline_mode = #tpu.pipeline_mode<synchronous>, transform_indices = @transform_2, window_bounds = array<i64: 1, 128>}, {pipeline_mode = #tpu.pipeline_mode<synchronous>, transform_indices = @transform_3, window_bounds = array<i64: 1, 128>}, {transform_indices = @transform_4, window_bounds = array<i64: 1, 256, 8>}]} {
    %c16_i32 = arith.constant 16 : i32
    %0 = arith.muli %arg1, %c16_i32 : i32
    %c1_i32 = arith.constant 1 : i32
    %1 = arith.muli %0, %c1_i32 : i32
    %c0_i32 = arith.constant 0 : i32
    %2 = arith.addi %1, %c0_i32 : i32
    %c0 = arith.constant 0 : index
    %3 = arith.index_cast %2 : i32 to index
    %c0_0 = arith.constant 0 : index
    %c0_1 = arith.constant 0 : index
    %4 = vector.load %arg2[%c0, %3, %c0_0, %c0_1] : memref<1x18x16x12xbf16, #tpu.memory_space<vmem>>, vector<1x16x16x12xbf16>
    %5 = vector.shape_cast %4 : vector<1x16x16x12xbf16> to vector<16x16x12xbf16>
    %6 = vector.shape_cast %5 : vector<16x16x12xbf16> to vector<256x12xbf16>
    %c0_2 = arith.constant 0 : index
    %c0_3 = arith.constant 0 : index
    %c0_4 = arith.constant 0 : index
    %7 = vector.load %arg3[%c0_2, %c0_3, %c0_4] : memref<3x12x128xbf16, #tpu.memory_space<vmem>>, vector<1x12x128xbf16>
    %8 = vector.shape_cast %7 : vector<1x12x128xbf16> to vector<12x128xbf16>
    %cst = arith.constant dense<0.000000e+00> : vector<256x128xf32>
    %9 = tpu.matmul %6, %8, %cst {dimension_numbers = #tpu.dot_dimension_numbers<[1], [0], [0], [1], [0, 0, 1, 1], [], []>} : vector<256x12xbf16>, vector<12x128xbf16>, vector<256x128xf32> -> vector<256x128xf32>
    %c1_i32_5 = arith.constant 1 : i32
    %10 = arith.addi %1, %c1_i32_5 : i32
    %c0_6 = arith.constant 0 : index
    %11 = arith.index_cast %10 : i32 to index
    %c0_7 = arith.constant 0 : index
    %c0_8 = arith.constant 0 : index
    %12 = vector.load %arg2[%c0_6, %11, %c0_7, %c0_8] : memref<1x18x16x12xbf16, #tpu.memory_space<vmem>>, vector<1x16x16x12xbf16>
    %13 = vector.shape_cast %12 : vector<1x16x16x12xbf16> to vector<16x16x12xbf16>
    %14 = vector.shape_cast %13 : vector<16x16x12xbf16> to vector<256x12xbf16>
    %c1 = arith.constant 1 : index
    %c0_9 = arith.constant 0 : index
    %c0_10 = arith.constant 0 : index
    %15 = vector.load %arg3[%c1, %c0_9, %c0_10] : memref<3x12x128xbf16, #tpu.memory_space<vmem>>, vector<1x12x128xbf16>
    %16 = vector.shape_cast %15 : vector<1x12x128xbf16> to vector<12x128xbf16>
    %cst_11 = arith.constant dense<0.000000e+00> : vector<256x128xf32>
    %17 = tpu.matmul %14, %16, %cst_11 {dimension_numbers = #tpu.dot_dimension_numbers<[1], [0], [0], [1], [0, 0, 1, 1], [], []>} : vector<256x12xbf16>, vector<12x128xbf16>, vector<256x128xf32> -> vector<256x128xf32>
    %18 = arith.addf %9, %17 : vector<256x128xf32>
    %c2_i32 = arith.constant 2 : i32
    %19 = arith.addi %1, %c2_i32 : i32
    %c0_12 = arith.constant 0 : index
    %20 = arith.index_cast %19 : i32 to index
    %c0_13 = arith.constant 0 : index
    %c0_14 = arith.constant 0 : index
    %21 = vector.load %arg2[%c0_12, %20, %c0_13, %c0_14] : memref<1x18x16x12xbf16, #tpu.memory_space<vmem>>, vector<1x16x16x12xbf16>
    %22 = vector.shape_cast %21 : vector<1x16x16x12xbf16> to vector<16x16x12xbf16>
    %23 = vector.shape_cast %22 : vector<16x16x12xbf16> to vector<256x12xbf16>
    %c2 = arith.constant 2 : index
    %c0_15 = arith.constant 0 : index
    %c0_16 = arith.constant 0 : index
    %24 = vector.load %arg3[%c2, %c0_15, %c0_16] : memref<3x12x128xbf16, #tpu.memory_space<vmem>>, vector<1x12x128xbf16>
    %25 = vector.shape_cast %24 : vector<1x12x128xbf16> to vector<12x128xbf16>
    %cst_17 = arith.constant dense<0.000000e+00> : vector<256x128xf32>
    %26 = tpu.matmul %23, %25, %cst_17 {dimension_numbers = #tpu.dot_dimension_numbers<[1], [0], [0], [1], [0, 0, 1, 1], [], []>} : vector<256x12xbf16>, vector<12x128xbf16>, vector<256x128xf32> -> vector<256x128xf32>
    %27 = arith.addf %18, %26 : vector<256x128xf32>
    %c0_18 = arith.constant 0 : index
    %c0_19 = arith.constant 0 : index
    %28 = vector.load %arg4[%c0_18, %c0_19] : memref<1x128xf32, #tpu.memory_space<vmem>>, vector<1x128xf32>
    %29 = vector.broadcast %28 : vector<1x128xf32> to vector<256x128xf32>
    %30 = arith.mulf %27, %29 : vector<256x128xf32>
    %c0_20 = arith.constant 0 : index
    %c0_21 = arith.constant 0 : index
    %31 = vector.load %arg5[%c0_20, %c0_21] : memref<1x128xf32, #tpu.memory_space<vmem>>, vector<1x128xf32>
    %32 = vector.broadcast %31 : vector<1x128xf32> to vector<256x128xf32>
    %33 = arith.addf %30, %32 : vector<256x128xf32>
    %cst_22 = arith.constant 0.000000e+00 : f32
    %34 = vector.broadcast %cst_22 : f32 to vector<256x128xf32>
    %35 = arith.maximumf %33, %34 : vector<256x128xf32>
    %36 = vector.extract_strided_slice %35 {offsets = [0, 0], sizes = [256, 8], strides = [1, 1]} : vector<256x128xf32> to vector<256x8xf32>
    %c0_23 = arith.constant 0 : index
    %c0_24 = arith.constant 0 : index
    %c0_25 = arith.constant 0 : index
    %37 = vector.load %arg6[%c0_23, %c0_24, %c0_25] : memref<1x256x8xf32, #tpu.memory_space<vmem>>, vector<1x256x8xf32>
    %38 = vector.shape_cast %37 : vector<1x256x8xf32> to vector<256x8xf32>
    %39 = vector.shape_cast %36 : vector<256x8xf32> to vector<1x256x8xf32>
    tpu.vector_store %arg6[%c0_23, %c0_24, %c0_25], %39 {strides = array<i32>} : memref<1x256x8xf32, #tpu.memory_space<vmem>>, vector<1x256x8xf32>,
    return
  }
  func.func @transform_0(%arg0: i32, %arg1: i32) -> (i32, i32, i32, i32) {
    %c0_i32 = arith.constant 0 : i32
    %c0_i32_0 = arith.constant 0 : i32
    %c0_i32_1 = arith.constant 0 : i32
    %c0_i32_2 = arith.constant 0 : i32
    return %arg0, %c0_i32, %c0_i32_0, %c0_i32_1 : i32, i32, i32, i32
  }
  func.func @transform_1(%arg0: i32, %arg1: i32) -> (i32, i32, i32) {
    %c0_i32 = arith.constant 0 : i32
    %c0_i32_0 = arith.constant 0 : i32
    %c0_i32_1 = arith.constant 0 : i32
    %c0_i32_2 = arith.constant 0 : i32
    return %c0_i32, %c0_i32_0, %c0_i32_1 : i32, i32, i32
  }
  func.func @transform_2(%arg0: i32, %arg1: i32) -> (i32, i32) {
    %c0_i32 = arith.constant 0 : i32
    %c0_i32_0 = arith.constant 0 : i32
    %c0_i32_1 = arith.constant 0 : i32
    return %c0_i32, %c0_i32_0 : i32, i32
  }
  func.func @transform_3(%arg0: i32, %arg1: i32) -> (i32, i32) {
    %c0_i32 = arith.constant 0 : i32
    %c0_i32_0 = arith.constant 0 : i32
    %c0_i32_1 = arith.constant 0 : i32
    return %c0_i32, %c0_i32_0 : i32, i32
  }
  func.func @transform_4(%arg0: i32, %arg1: i32) -> (i32, i32, i32) {
    %c0_i32 = arith.constant 0 : i32
    %c0_i32_0 = arith.constant 0 : i32
    return %arg0, %arg1, %c0_i32 : i32, i32, i32
  }
}

</mosaic_0001>

<llo_original>
// kernel: tpu_custom_call.1
$region0: #{tpu_custom_call.1}
  #allocation0 [shape = 'u32[]', space=smem, size = 0x4, offset = 0x4, fixed_abs, tag = 'smem constant byte address 0x4 - core index']
  #allocation1 [shape = 'u32[144,128]{1,0:T(1,128)}', space=vmem, size = 0x12000, scoped, tag = 'internal scratch']
  %s0 = inlined_call_operand.vmem [shape: bf16[2,18,16,12], index: 0, kind: input, shape index: {}]
  %s1 = inlined_call_operand.vmem [shape: bf16[3,12,128], index: 1, kind: input, shape index: {}]
  %s2 = inlined_call_operand.vmem [shape: f32[1,128], index: 2, kind: input, shape index: {}]
  %s3 = inlined_call_operand.vmem [shape: f32[1,128], index: 3, kind: input, shape index: {}]
  %s4 = inlined_call_operand.vmem [shape: f32[2,256,8], index: 4, kind: output, shape index: {}]
  %s5 = sld [smem:[#allocation0]]
  $region49: #{tpu_custom_call.1} parent=0
    _
  %s7 = ssub.s32 1, %s5
  %s8 = scalar_select 0, %s7, %s5
  loop: start=0, step=1, limit=4
  $region2: #{tpu_custom_call.1} parent=0 // loop_pre_header
    _
  $region3: #{tpu_custom_call.1} parent=0 // loop_header
    %s10 = sphi 0, %s14
    %p11 = scmp.ge.s32.totalorder %s10, 4
    %s17 = sphi 0, %s29
    %s18 = sphi 0, %s25
    %s19 = sphi 0, %s17
    %s20 = sphi 0, %s18
    %s21 = sphi 0, %s19
    %s22 = sphi 0, %s20
    %s32 = sphi 0, %s34
    %s35 = sphi 0, %s32
    %s36 = sphi 0, %s35
    %s52 = sphi 0, %s36
    %s56 = sphi 0, %s56
    %s58 = sphi 0, %s56
    %s59 = sphi 0, %s58
    %s73 = sphi 0, %s59
    %s77 = sphi 0, %s77
    %s79 = sphi 0, %s77
    %s80 = sphi 0, %s79
    %s94 = sphi 0, %s80
    %s98 = sphi 0, %s98
    %s100 = sphi 0, %s98
    %s101 = sphi 0, %s100
    %s115 = sphi 0, %s101
    %s123 = sphi 0, %s125
    %s126 = sphi 0, %s123
    %s127 = sphi 0, %s126
    %s143 = sphi 0, %s127
  $region4: #{tpu_custom_call.1} parent=0 // loop_header_branch
    %13 = sbr.rel (%p11) target = $region8
  $region5: #{tpu_custom_call.1} parent=0 // loop_body
    %s15 = ssub.s32 %s10, 1
    %s16 = ssub.s32 %s10, 2
    %s23 = sadd.s32 1, %s18
    %p24 = scmp.ge.s32.totalorder %s23, 1
    %s25 = scalar_select %p24, 0, %s23
    %s26 = sadd.s32 1, %s17
    %s27 = scalar_select %p24, %s26, %s17
    %p28 = scmp.ge.s32.totalorder %s27, 2
    %s29 = scalar_select %p28, 0, %s27
    %s30 = ssub.s32 %s17, %s29
    %p31 = scmp.eq.s32.totalorder %s30, 0
    %s33 = sadd.s32 %s32, 1
    %s34 = scalar_select %p31, %s32, %s33
    %p37 = pneg %p31
    %p38 = scmp.eq.s32.totalorder %s10, 1
    %p39 = por %p37, %p38
    %p40 = scmp.ne.s32.totalorder %s32, %s35
    %p41 = scmp.eq.s32.totalorder %s10, 0
    %p42 = por %p40, %p41
    %p43 = scmp.ne.s32.totalorder %s32, %s35
    %p44 = scmp.eq.s32.totalorder %s15, 1
    %p45 = por %p43, %p44
    %p46 = scmp.ne.s32.totalorder %s35, %s36
    %p47 = scmp.eq.s32.totalorder %s15, 0
    %p48 = por %p46, %p47
    %p49 = scmp.ne.s32.totalorder %s35, %s36
    %p50 = scmp.eq.s32.totalorder %s16, 1
    %p51 = por %p49, %p50
    %p53 = scmp.ne.s32.totalorder %s36, %s52
    %p54 = scmp.eq.s32.totalorder %s16, 0
    %p55 = por %p53, %p54
    %s57 = sadd.s32 %s56, 1
    %p60 = scmp.eq.s32.totalorder %s10, 1
    %p61 = scmp.ne.s32.totalorder %s56, %s58
    %p62 = scmp.eq.s32.totalorder %s10, 0
    %p63 = por %p61, %p62
    %p64 = scmp.ne.s32.totalorder %s56, %s58
    %p65 = scmp.eq.s32.totalorder %s15, 1
    %p66 = por %p64, %p65
    %p67 = scmp.ne.s32.totalorder %s58, %s59
    %p68 = scmp.eq.s32.totalorder %s15, 0
    %p69 = por %p67, %p68
    %p70 = scmp.ne.s32.totalorder %s58, %s59
    %p71 = scmp.eq.s32.totalorder %s16, 1
    %p72 = por %p70, %p71
    %p74 = scmp.ne.s32.totalorder %s59, %s73
    %p75 = scmp.eq.s32.totalorder %s16, 0
    %p76 = por %p74, %p75
    %s78 = sadd.s32 %s77, 1
    %p81 = scmp.eq.s32.totalorder %s10, 1
    %p82 = scmp.ne.s32.totalorder %s77, %s79
    %p83 = scmp.eq.s32.totalorder %s10, 0
    %p84 = por %p82, %p83
    %p85 = scmp.ne.s32.totalorder %s77, %s79
    %p86 = scmp.eq.s32.totalorder %s15, 1
    %p87 = por %p85, %p86
    %p88 = scmp.ne.s32.totalorder %s79, %s80
    %p89 = scmp.eq.s32.totalorder %s15, 0
    %p90 = por %p88, %p89
    %p91 = scmp.ne.s32.totalorder %s79, %s80
    %p92 = scmp.eq.s32.totalorder %s16, 1
    %p93 = por %p91, %p92
    %p95 = scmp.ne.s32.totalorder %s80, %s94
    %p96 = scmp.eq.s32.totalorder %s16, 0
    %p97 = por %p95, %p96
    %s99 = sadd.s32 %s98, 1
    %p102 = scmp.eq.s32.totalorder %s10, 1
    %p103 = scmp.ne.s32.totalorder %s98, %s100
    %p104 = scmp.eq.s32.totalorder %s10, 0
    %p105 = por %p103, %p104
    %p106 = scmp.ne.s32.totalorder %s98, %s100
    %p107 = scmp.eq.s32.totalorder %s15, 1
    %p108 = por %p106, %p107
    %p109 = scmp.ne.s32.totalorder %s100, %s101
    %p110 = scmp.eq.s32.totalorder %s15, 0
    %p111 = por %p109, %p110
    %p112 = scmp.ne.s32.totalorder %s100, %s101
    %p113 = scmp.eq.s32.totalorder %s16, 1
    %p114 = por %p112, %p113
    %p116 = scmp.ne.s32.totalorder %s101, %s115
    %p117 = scmp.eq.s32.totalorder %s16, 0
    %p118 = por %p116, %p117
    %s119 = ssub.s32 %s17, %s29
    %s120 = ssub.s32 %s18, %s25
    %s121 = sor.u32 %s119, %s120
    %p122 = scmp.eq.s32.totalorder %s121, 0
    %s124 = sadd.s32 %s123, 1
    %s125 = scalar_select %p122, %s123, %s124
    %p128 = pneg %p122
    %p129 = scmp.eq.s32.totalorder %s10, 1
    %p130 = por %p128, %p129
    %p131 = scmp.ne.s32.totalorder %s123, %s126
    %p132 = scmp.eq.s32.totalorder %s10, 0
    %p133 = por %p131, %p132
    %p134 = scmp.ne.s32.totalorder %s123, %s126
    %p135 = scmp.eq.s32.totalorder %s15, 1
    %p136 = por %p134, %p135
    %p137 = scmp.ne.s32.totalorder %s126, %s127
    %p138 = scmp.eq.s32.totalorder %s15, 0
    %p139 = por %p137, %p138
    %p140 = scmp.ne.s32.totalorder %s126, %s127
    %p141 = scmp.eq.s32.totalorder %s16, 1
    %p142 = por %p140, %p141
    %p144 = scmp.ne.s32.totalorder %s127, %s143
    %p145 = scmp.eq.s32.totalorder %s16, 0
    %p146 = por %p144, %p145
    %p147 = scmp.le.s32.totalorder 1, %s10
    %p148 = scmp.lt.s32.totalorder %s10, 3
    %p149 = pnand %p147, %p148
    %p150 = pneg %p149
    // Predicated region
    $region9: #{tpu_custom_call.1} parent=5 // pred_check
      _
    $region10: #{tpu_custom_call.1} parent=5 // pred_check_branch
      %152 = sbr.rel (%p149) target = $region12
    $region11: #{tpu_custom_call.1} parent=5 // pred_region
      %s153 = ssub.s32 %s10, 1
      // Predicated region
      $region13: #{tpu_custom_call.1} parent=11 // pred_check
        %p154 = pneg %p69
      $region14: #{tpu_custom_call.1} parent=11 // pred_check_branch
        %156 = sbr.rel (%p154) target = $region16
      $region15: #{tpu_custom_call.1} parent=11 // pred_region
        _
      $region16: #{tpu_custom_call.1} parent=11 // pred_fallthru
        _
      // Predicated region
      $region17: #{tpu_custom_call.1} parent=11 // pred_check
        %p157 = pneg %p90
      $region18: #{tpu_custom_call.1} parent=11 // pred_check_branch
        %159 = sbr.rel (%p157) target = $region20
      $region19: #{tpu_custom_call.1} parent=11 // pred_region
        _
      $region20: #{tpu_custom_call.1} parent=11 // pred_fallthru
        _
      // Predicated region
      $region21: #{tpu_custom_call.1} parent=11 // pred_check
        %p160 = pneg %p111
      $region22: #{tpu_custom_call.1} parent=11 // pred_check_branch
        %162 = sbr.rel (%p160) target = $region24
      $region23: #{tpu_custom_call.1} parent=11 // pred_region
        _
      $region24: #{tpu_custom_call.1} parent=11 // pred_fallthru
        _
    $region12: #{tpu_custom_call.1} parent=5 // pred_fallthru
      _
    %p163 = scmp.lt.s32.totalorder %s10, 2
    // Predicated region
    $region25: #{tpu_custom_call.1} parent=5 // pred_check
      %p164 = pneg %p163
    $region26: #{tpu_custom_call.1} parent=5 // pred_check_branch
      %166 = sbr.rel (%p164) target = $region28
    $region27: #{tpu_custom_call.1} parent=5 // pred_region
      // Predicated region
      $region29: #{tpu_custom_call.1} parent=27 // pred_check
        %p167 = pneg %p42
      $region30: #{tpu_custom_call.1} parent=27 // pred_check_branch
        %169 = sbr.rel (%p167) target = $region32
      $region31: #{tpu_custom_call.1} parent=27 // pred_region
        %p170 = scmp.lt.s32.totalorder %s17, 1
        %s171 = scalar_select %p170, %s17, 1
        %s172 = smul.addr %s171, 36
        %s173 = smul.addr %s172, 4
        %s174 = scalar_lea.vmem %s0, %s173
      $region32: #{tpu_custom_call.1} parent=27 // pred_fallthru
        _
    $region28: #{tpu_custom_call.1} parent=5 // pred_fallthru
      _
    %p175 = scmp.le.s32.totalorder 1, %s10
    %p176 = scmp.lt.s32.totalorder %s10, 3
    %p177 = pnand %p175, %p176
    %p178 = pneg %p177
    // Predicated region
    $region33: #{tpu_custom_call.1} parent=5 // pred_check
      _
    $region34: #{tpu_custom_call.1} parent=5 // pred_check_branch
      %180 = sbr.rel (%p177) target = $region36
    $region35: #{tpu_custom_call.1} parent=5 // pred_region
      %s181 = ssub.s32 %s10, 1
      %p182 = scmp.lt.s32.totalorder %s19, 1
      %s183 = scalar_select %p182, %s19, 1
      %s184 = smul.addr %s183, 36
      %s185 = smul.addr %s184, 4
      %s186 = scalar_lea.vmem %s0, %s185
      %p187 = pneg %p48
      %p188 = pneg %p45
      %p189 = pneg %p69
      %p190 = pneg %p66
      %p191 = pneg %p90
      %p192 = pneg %p87
      %p193 = pneg %p111
      %p194 = pneg %p108
      %p195 = pneg %p139
      %p196 = pneg %p136
      %s197 = smul.u32 32, %s20
      %p198 = scmp.lt.s32.totalorder %s19, 1
      %s199 = scalar_select %p198, %s19, 1
      %p200 = scmp.lt.s32.totalorder %s197, 31
      %s201 = scalar_select %p200, %s197, 31
      %s202 = smul.addr %s199, 32
      %s203 = sadd.s32 %s201, %s202
      %s204 = smul.addr %s203, 8
      %s205 = scalar_lea.vmem %s4, %s204
      %p206 = scmp.lt.s32.totalorder %s19, 1
      %s207 = scalar_select %p206, %s19, 1
      %s208 = smul.addr %s207, 36
      %s209 = smul.addr %s208, 4
      %s210 = scalar_lea.vmem %s0, %s209
      %s211 = smul.u32 32, %s20
      %p212 = scmp.lt.s32.totalorder %s19, 1
      %s213 = scalar_select %p212, %s19, 1
      %p214 = scmp.lt.s32.totalorder %s211, 31
      %s215 = scalar_select %p214, %s211, 31
      %s216 = smul.addr %s213, 32
      %s217 = sadd.s32 %s215, %s216
      %s218 = smul.addr %s217, 8
      %s219 = scalar_lea.vmem %s4, %s218
      %s220 = smul.u32 32, %s20
      %s222 = smul.u32 %s20, 16
      %s223 = smul.u32 %s222, 2
      %s224 = smul.addr %s223, 4
      %s225 = scalar_lea.vmem %s210, %s224
      %v226 = vld [vmem:[%s225] sm:$0xf]
      %v227 = vld [vmem:[%s225 + $0x4] sm:$0xf]
      %v228 = vld [vmem:[%s225 + $0x8] sm:$0xf]
      %v229 = vld [vmem:[%s225 + $0xc] sm:$0xf]
      %v230 = vld [vmem:[%s225 + $0x10] sm:$0xf]
      %v231 = vld [vmem:[%s225 + $0x14] sm:$0xf]
      %v232 = vld [vmem:[%s225 + $0x18] sm:$0xf]
      %v233 = vld [vmem:[%s225 + $0x1c] sm:$0xf]
      %v234 = vld [vmem:[%s225 + $0x20] sm:$0xf]
      %v235 = vld [vmem:[%s225 + $0x24] sm:$0xf]
      %v236 = vld [vmem:[%s225 + $0x28] sm:$0xf]
      %v237 = vld [vmem:[%s225 + $0x2c] sm:$0xf]
      %v238 = vld [vmem:[%s225 + $0x30] sm:$0xf]
      %v239 = vld [vmem:[%s225 + $0x34] sm:$0xf]
      %v240 = vld [vmem:[%s225 + $0x38] sm:$0xf]
      %v241 = vld [vmem:[%s225 + $0x3c] sm:$0xf]
      %v242 = vld [vmem:[%s225 + $0x40] sm:$0xf]
      %v243 = vld [vmem:[%s225 + $0x44] sm:$0xf]
      %v244 = vld [vmem:[%s225 + $0x48] sm:$0xf]
      %v245 = vld [vmem:[%s225 + $0x4c] sm:$0xf]
      %v246 = vld [vmem:[%s225 + $0x50] sm:$0xf]
      %v247 = vld [vmem:[%s225 + $0x54] sm:$0xf]
      %v248 = vld [vmem:[%s225 + $0x58] sm:$0xf]
      %v249 = vld [vmem:[%s225 + $0x5c] sm:$0xf]
      %v250 = vld [vmem:[%s225 + $0x60] sm:$0xf]
      %v251 = vld [vmem:[%s225 + $0x64] sm:$0xf]
      %v252 = vld [vmem:[%s225 + $0x68] sm:$0xf]
      %v253 = vld [vmem:[%s225 + $0x6c] sm:$0xf]
      %v254 = vld [vmem:[%s225 + $0x70] sm:$0xf]
      %v255 = vld [vmem:[%s225 + $0x74] sm:$0xf]
      %v256 = vld [vmem:[%s225 + $0x78] sm:$0xf]
      %v257 = vld [vmem:[%s225 + $0x7c] sm:$0xf]
      %v258 = vld [vmem:[%s1] sm:$0xf]
      %v259 = vld [vmem:[%s1 + $0x4] sm:$0x3]
      %s260 = sadd.s32 %s222, 1
      %s261 = smul.u32 %s260, 2
      %s262 = smul.addr %s261, 4
      %s263 = scalar_lea.vmem %s210, %s262
      %v264 = vld [vmem:[%s263] sm:$0xf]
      %v265 = vld [vmem:[%s263 + $0x4] sm:$0xf]
      %v266 = vld [vmem:[%s263 + $0x8] sm:$0xf]
      %v267 = vld [vmem:[%s263 + $0xc] sm:$0xf]
      %v268 = vld [vmem:[%s263 + $0x10] sm:$0xf]
      %v269 = vld [vmem:[%s263 + $0x14] sm:$0xf]
      %v270 = vld [vmem:[%s263 + $0x18] sm:$0xf]
      %v271 = vld [vmem:[%s263 + $0x1c] sm:$0xf]
      %v272 = vld [vmem:[%s263 + $0x20] sm:$0xf]
      %v273 = vld [vmem:[%s263 + $0x24] sm:$0xf]
      %v274 = vld [vmem:[%s263 + $0x28] sm:$0xf]
      %v275 = vld [vmem:[%s263 + $0x2c] sm:$0xf]
      %v276 = vld [vmem:[%s263 + $0x30] sm:$0xf]
      %v277 = vld [vmem:[%s263 + $0x34] sm:$0xf]
      %v278 = vld [vmem:[%s263 + $0x38] sm:$0xf]
      %v279 = vld [vmem:[%s263 + $0x3c] sm:$0xf]
      %v280 = vld [vmem:[%s263 + $0x40] sm:$0xf]
      %v281 = vld [vmem:[%s263 + $0x44] sm:$0xf]
      %v282 = vld [vmem:[%s263 + $0x48] sm:$0xf]
      %v283 = vld [vmem:[%s263 + $0x4c] sm:$0xf]
      %v284 = vld [vmem:[%s263 + $0x50] sm:$0xf]
      %v285 = vld [vmem:[%s263 + $0x54] sm:$0xf]
      %v286 = vld [vmem:[%s263 + $0x58] sm:$0xf]
      %v287 = vld [vmem:[%s263 + $0x5c] sm:$0xf]
      %v288 = vld [vmem:[%s263 + $0x60] sm:$0xf]
      %v289 = vld [vmem:[%s263 + $0x64] sm:$0xf]
      %v290 = vld [vmem:[%s263 + $0x68] sm:$0xf]
      %v291 = vld [vmem:[%s263 + $0x6c] sm:$0xf]
      %v292 = vld [vmem:[%s263 + $0x70] sm:$0xf]
      %v293 = vld [vmem:[%s263 + $0x74] sm:$0xf]
      %v294 = vld [vmem:[%s263 + $0x78] sm:$0xf]
      %v295 = vld [vmem:[%s263 + $0x7c] sm:$0xf]
      %s296 = scalar_lea.vmem %s1, 8
      %v297 = vld [vmem:[%s296] sm:$0xf]
      %v298 = vld [vmem:[%s296 + $0x4] sm:$0x3]
      %v331 = vunpack.c.l.b16 %v264
      %v332 = vunpack.c.l.b16 %v265
      %v333 = vunpack.c.l.b16 %v266
      %v334 = vunpack.c.l.b16 %v267
      %v335 = vunpack.c.l.b16 %v268
      %v336 = vunpack.c.l.b16 %v269
      %v337 = vunpack.c.l.b16 %v270
      %v338 = vunpack.c.l.b16 %v271
      %v339 = vunpack.c.l.b16 %v272
      %v340 = vunpack.c.l.b16 %v273
      %v341 = vunpack.c.l.b16 %v274
      %v342 = vunpack.c.l.b16 %v275
      %v343 = vunpack.c.l.b16 %v276
      %v344 = vunpack.c.l.b16 %v277
      %v345 = vunpack.c.l.b16 %v278
      %v346 = vunpack.c.l.b16 %v279
      %v347 = vunpack.c.l.b16 %v280
      %v348 = vunpack.c.l.b16 %v281
      %v349 = vunpack.c.l.b16 %v282
      %v350 = vunpack.c.l.b16 %v283
      %v351 = vunpack.c.l.b16 %v284
      %v352 = vunpack.c.l.b16 %v285
      %v353 = vunpack.c.l.b16 %v286
      %v354 = vunpack.c.l.b16 %v287
      %v355 = vunpack.c.l.b16 %v288
      %v356 = vunpack.c.l.b16 %v289
      %v357 = vunpack.c.l.b16 %v290
      %v358 = vunpack.c.l.b16 %v291
      %v359 = vunpack.c.l.b16 %v292
      %v360 = vunpack.c.l.b16 %v293
      %v361 = vunpack.c.l.b16 %v294
      %v362 = vunpack.c.l.b16 %v295
      %v363 = vpack.c.b16 %v332, %v331
      %v364 = vpack.c.b16 %v334, %v333
      %v365 = vpack.c.b16 %v336, %v335
      %v366 = vpack.c.b16 %v338, %v337
      %v367 = vpack.c.b16 %v340, %v339
      %v368 = vpack.c.b16 %v342, %v341
      %v369 = vpack.c.b16 %v344, %v343
      %v370 = vpack.c.b16 %v346, %v345
      %v371 = vpack.c.b16 %v348, %v347
      %v372 = vpack.c.b16 %v350, %v349
      %v373 = vpack.c.b16 %v352, %v351
      %v374 = vpack.c.b16 %v354, %v353
      %v375 = vpack.c.b16 %v356, %v355
      %v376 = vpack.c.b16 %v358, %v357
      %v377 = vpack.c.b16 %v360, %v359
      %v378 = vpack.c.b16 %v362, %v361
      %v381 = vunpack.c.l.b16 %v297
      %v382 = vunpack.c.l.b16 %v298
      %v383 = vpack.c.b16 %v382, %v381
      %vm384 = vcmask 97280
      %v386 = vsel %vm384, %v363, 0
      %v389 = vsel %vm384, %v364, 0
      %v392 = vsel %vm384, %v365, 0
      %v395 = vsel %vm384, %v366, 0
      %v398 = vsel %vm384, %v367, 0
      %v401 = vsel %vm384, %v368, 0
      %v404 = vsel %vm384, %v369, 0
      %v407 = vsel %vm384, %v370, 0
      %v410 = vsel %vm384, %v371, 0
      %v413 = vsel %vm384, %v372, 0
      %v416 = vsel %vm384, %v373, 0
      %v419 = vsel %vm384, %v374, 0
      %v422 = vsel %vm384, %v375, 0
      %v425 = vsel %vm384, %v376, 0
      %v428 = vsel %vm384, %v377, 0
      %v431 = vsel %vm384, %v378, 0
      %vm433 = vcmask 1045504
      %v435 = vsel %vm433, %v383, 0
      %437 = vmatprep.subr.bf16.mxu0 0
      %438 = vmatpush1.bf16.msra.mxu0 %v435
      %439 = vmatprep.subr.bf16.mxu0 0
      %440 = vmatpush1.bf16.msra.mxu0 0
      %441 = vmatprep.subr.bf16.mxu0 0
      %442 = vmatpush1.bf16.msra.mxu0 0
      %443 = vmatprep.subr.bf16.mxu0 0
      %444 = vmatpush1.bf16.msra.mxu0 0
      %445 = vmatprep.subr.bf16.mxu0 0
      %446 = vmatpush1.bf16.msra.mxu0 0
      %447 = vmatprep.subr.bf16.mxu0 0
      %448 = vmatpush1.bf16.msra.mxu0 0
      %449 = vmatprep.subr.bf16.mxu0 0
      %450 = vmatpush1.bf16.msra.mxu0 0
      %451 = vmatprep.subr.bf16.mxu0 0
      %452 = vmatpush1.bf16.msra.mxu0 0
      %453 = vmatprep.subr.bf16.mxu0 0
      %454 = vmatpush1.bf16.msra.mxu0 0
      %455 = vmatprep.subr.bf16.mxu0 0
      %456 = vmatpush1.bf16.msra.mxu0 0
      %457 = vmatprep.subr.bf16.mxu0 0
      %458 = vmatpush1.bf16.msra.mxu0 0
      %459 = vmatprep.subr.bf16.mxu0 0
      %460 = vmatpush1.bf16.msra.mxu0 0
      %461 = vmatprep.subr.bf16.mxu0 0
      %462 = vmatpush1.bf16.msra.mxu0 0
      %463 = vmatprep.subr.bf16.mxu0 0
      %464 = vmatpush1.bf16.msra.mxu0 0
      %465 = vmatprep.subr.bf16.mxu0 0
      %466 = vmatpush1.bf16.msra.mxu0 0
      %467 = vmatprep.subr.bf16.mxu0 0
      %468 = vmatpush1.bf16.msra.mxu0 0
      %469 = vmatprep.mubr.bf16.mxu0 0
      %470 = vmatmul.mubr.bf16.gmra.mrb[0].mxu0 %v386
      %v471 = vpop.f32.mrb[0].mxu0
      %v472 = vadd.f32 0.0, %v471
      %v473 = vpop.f32.mrb[0].mxu0
      %v474 = vpop.f32.mrb[0].mxu0
      %v475 = vadd.f32 0.0, %v474
      %v476 = vpop.f32.mrb[0].mxu0
      %477 = vmatprep.mubr.bf16.mxu0 0
      %478 = vmatmul.mubr.bf16.gmra.mrb[0].mxu0 %v389
      %v479 = vpop.f32.mrb[0].mxu0
      %v480 = vadd.f32 0.0, %v479
      %v481 = vpop.f32.mrb[0].mxu0
      %v482 = vpop.f32.mrb[0].mxu0
      %v483 = vadd.f32 0.0, %v482
      %v484 = vpop.f32.mrb[0].mxu0
      %485 = vmatprep.mubr.bf16.mxu0 0
      %486 = vmatmul.mubr.bf16.gmra.mrb[0].mxu0 %v392
      %v487 = vpop.f32.mrb[0].mxu0
      %v488 = vadd.f32 0.0, %v487
      %v489 = vpop.f32.mrb[0].mxu0
      %v490 = vpop.f32.mrb[0].mxu0
      %v491 = vadd.f32 0.0, %v490
      %v492 = vpop.f32.mrb[0].mxu0
      %493 = vmatprep.mubr.bf16.mxu0 0
      %494 = vmatmul.mubr.bf16.gmra.mrb[0].mxu0 %v395
      %v495 = vpop.f32.mrb[0].mxu0
      %v496 = vadd.f32 0.0, %v495
      %v497 = vpop.f32.mrb[0].mxu0
      %v498 = vpop.f32.mrb[0].mxu0
      %v499 = vadd.f32 0.0, %v498
      %v500 = vpop.f32.mrb[0].mxu0
      %501 = vmatprep.mubr.bf16.mxu0 0
      %502 = vmatmul.mubr.bf16.gmra.mrb[0].mxu0 %v398
      %v503 = vpop.f32.mrb[0].mxu0
      %v504 = vadd.f32 0.0, %v503
      %v505 = vpop.f32.mrb[0].mxu0
      %v506 = vpop.f32.mrb[0].mxu0
      %v507 = vadd.f32 0.0, %v506
      %v508 = vpop.f32.mrb[0].mxu0
      %509 = vmatprep.mubr.bf16.mxu0 0
      %510 = vmatmul.mubr.bf16.gmra.mrb[0].mxu0 %v401
      %v511 = vpop.f32.mrb[0].mxu0
      %v512 = vadd.f32 0.0, %v511
      %v513 = vpop.f32.mrb[0].mxu0
      %v514 = vpop.f32.mrb[0].mxu0
      %v515 = vadd.f32 0.0, %v514
      %v516 = vpop.f32.mrb[0].mxu0
      %517 = vmatprep.mubr.bf16.mxu0 0
      %518 = vmatmul.mubr.bf16.gmra.mrb[0].mxu0 %v404
      %v519 = vpop.f32.mrb[0].mxu0
      %v520 = vadd.f32 0.0, %v519
      %v521 = vpop.f32.mrb[0].mxu0
      %v522 = vpop.f32.mrb[0].mxu0
      %v523 = vadd.f32 0.0, %v522
      %v524 = vpop.f32.mrb[0].mxu0
      %525 = vmatprep.mubr.bf16.mxu0 0
      %526 = vmatmul.mubr.bf16.gmra.mrb[0].mxu0 %v407
      %v527 = vpop.f32.mrb[0].mxu0
      %v528 = vadd.f32 0.0, %v527
      %v529 = vpop.f32.mrb[0].mxu0
      %v530 = vpop.f32.mrb[0].mxu0
      %v531 = vadd.f32 0.0, %v530
      %v532 = vpop.f32.mrb[0].mxu0
      %533 = vmatprep.mubr.bf16.mxu0 0
      %534 = vmatmul.mubr.bf16.gmra.mrb[0].mxu0 %v410
      %v535 = vpop.f32.mrb[0].mxu0
      %v536 = vadd.f32 0.0, %v535
      %v537 = vpop.f32.mrb[0].mxu0
      %v538 = vpop.f32.mrb[0].mxu0
      %v539 = vadd.f32 0.0, %v538
      %v540 = vpop.f32.mrb[0].mxu0
      %541 = vmatprep.mubr.bf16.mxu0 0
      %542 = vmatmul.mubr.bf16.gmra.mrb[0].mxu0 %v413
      %v543 = vpop.f32.mrb[0].mxu0
      %v544 = vadd.f32 0.0, %v543
      %v545 = vpop.f32.mrb[0].mxu0
      %v546 = vpop.f32.mrb[0].mxu0
      %v547 = vadd.f32 0.0, %v546
      %v548 = vpop.f32.mrb[0].mxu0
      %549 = vmatprep.mubr.bf16.mxu0 0
      %550 = vmatmul.mubr.bf16.gmra.mrb[0].mxu0 %v416
      %v551 = vpop.f32.mrb[0].mxu0
      %v552 = vadd.f32 0.0, %v551
      %v553 = vpop.f32.mrb[0].mxu0
      %v554 = vpop.f32.mrb[0].mxu0
      %v555 = vadd.f32 0.0, %v554
      %v556 = vpop.f32.mrb[0].mxu0
      %557 = vmatprep.mubr.bf16.mxu0 0
      %558 = vmatmul.mubr.bf16.gmra.mrb[0].mxu0 %v419
      %v559 = vpop.f32.mrb[0].mxu0
      %v560 = vadd.f32 0.0, %v559
      %v561 = vpop.f32.mrb[0].mxu0
      %v562 = vpop.f32.mrb[0].mxu0
      %v563 = vadd.f32 0.0, %v562
      %v564 = vpop.f32.mrb[0].mxu0
      %565 = vmatprep.mubr.bf16.mxu0 0
      %566 = vmatmul.mubr.bf16.gmra.mrb[0].mxu0 %v422
      %v567 = vpop.f32.mrb[0].mxu0
      %v568 = vadd.f32 0.0, %v567
      %v569 = vpop.f32.mrb[0].mxu0
      %v570 = vpop.f32.mrb[0].mxu0
      %v571 = vadd.f32 0.0, %v570
      %v572 = vpop.f32.mrb[0].mxu0
      %573 = vmatprep.mubr.bf16.mxu0 0
      %574 = vmatmul.mubr.bf16.gmra.mrb[0].mxu0 %v425
      %v575 = vpop.f32.mrb[0].mxu0
      %v576 = vadd.f32 0.0, %v575
      %v577 = vpop.f32.mrb[0].mxu0
      %v578 = vpop.f32.mrb[0].mxu0
      %v579 = vadd.f32 0.0, %v578
      %v580 = vpop.f32.mrb[0].mxu0
      %581 = vmatprep.mubr.bf16.mxu0 0
      %582 = vmatmul.mubr.bf16.gmra.mrb[0].mxu0 %v428
      %v583 = vpop.f32.mrb[0].mxu0
      %v584 = vadd.f32 0.0, %v583
      %v585 = vpop.f32.mrb[0].mxu0
      %v586 = vpop.f32.mrb[0].mxu0
      %v587 = vadd.f32 0.0, %v586
      %v588 = vpop.f32.mrb[0].mxu0
      %589 = vmatprep.mubr.bf16.mxu0 0
      %590 = vmatmul.mubr.bf16.gmra.mrb[0].mxu0 %v431
      %v591 = vpop.f32.mrb[0].mxu0
      %v592 = vadd.f32 0.0, %v591
      %v593 = vpop.f32.mrb[0].mxu0
      %v594 = vpop.f32.mrb[0].mxu0
      %v595 = vadd.f32 0.0, %v594
      %v596 = vpop.f32.mrb[0].mxu0
      %597 = vdwg.mxu0
      %v630 = vunpack.c.l.b16 %v226
      %v631 = vunpack.c.l.b16 %v227
      %v632 = vunpack.c.l.b16 %v228
      %v633 = vunpack.c.l.b16 %v229
      %v634 = vunpack.c.l.b16 %v230
      %v635 = vunpack.c.l.b16 %v231
      %v636 = vunpack.c.l.b16 %v232
      %v637 = vunpack.c.l.b16 %v233
      %v638 = vunpack.c.l.b16 %v234
      %v639 = vunpack.c.l.b16 %v235
      %v640 = vunpack.c.l.b16 %v236
      %v641 = vunpack.c.l.b16 %v237
      %v642 = vunpack.c.l.b16 %v238
      %v643 = vunpack.c.l.b16 %v239
      %v644 = vunpack.c.l.b16 %v240
      %v645 = vunpack.c.l.b16 %v241
      %v646 = vunpack.c.l.b16 %v242
      %v647 = vunpack.c.l.b16 %v243
      %v648 = vunpack.c.l.b16 %v244
      %v649 = vunpack.c.l.b16 %v245
      %v650 = vunpack.c.l.b16 %v246
      %v651 = vunpack.c.l.b16 %v247
      %v652 = vunpack.c.l.b16 %v248
      %v653 = vunpack.c.l.b16 %v249
      %v654 = vunpack.c.l.b16 %v250
      %v655 = vunpack.c.l.b16 %v251
      %v656 = vunpack.c.l.b16 %v252
      %v657 = vunpack.c.l.b16 %v253
      %v658 = vunpack.c.l.b16 %v254
      %v659 = vunpack.c.l.b16 %v255
      %v660 = vunpack.c.l.b16 %v256
      %v661 = vunpack.c.l.b16 %v257
      %v662 = vpack.c.b16 %v631, %v630
      %v663 = vpack.c.b16 %v633, %v632
      %v664 = vpack.c.b16 %v635, %v634
      %v665 = vpack.c.b16 %v637, %v636
      %v666 = vpack.c.b16 %v639, %v638
      %v667 = vpack.c.b16 %v641, %v640
      %v668 = vpack.c.b16 %v643, %v642
      %v669 = vpack.c.b16 %v645, %v644
      %v670 = vpack.c.b16 %v647, %v646
      %v671 = vpack.c.b16 %v649, %v648
      %v672 = vpack.c.b16 %v651, %v650
      %v673 = vpack.c.b16 %v653, %v652
      %v674 = vpack.c.b16 %v655, %v654
      %v675 = vpack.c.b16 %v657, %v656
      %v676 = vpack.c.b16 %v659, %v658
      %v677 = vpack.c.b16 %v661, %v660
      %v680 = vunpack.c.l.b16 %v258
      %v681 = vunpack.c.l.b16 %v259
      %v682 = vpack.c.b16 %v681, %v680
      %v684 = vsel %vm384, %v662, 0
      %v687 = vsel %vm384, %v663, 0
      %v690 = vsel %vm384, %v664, 0
      %v693 = vsel %vm384, %v665, 0
      %v696 = vsel %vm384, %v666, 0
      %v699 = vsel %vm384, %v667, 0
      %v702 = vsel %vm384, %v668, 0
      %v705 = vsel %vm384, %v669, 0
      %v708 = vsel %vm384, %v670, 0
      %v711 = vsel %vm384, %v671, 0
      %v714 = vsel %vm384, %v672, 0
      %v717 = vsel %vm384, %v673, 0
      %v720 = vsel %vm384, %v674, 0
      %v723 = vsel %vm384, %v675, 0
      %v726 = vsel %vm384, %v676, 0
      %v729 = vsel %vm384, %v677, 0
      %v732 = vsel %vm433, %v682, 0
      %734 = vmatprep.subr.bf16.mxu0 0
      %735 = vmatpush1.bf16.msra.mxu0 %v732
      %736 = vmatprep.subr.bf16.mxu0 0
      %737 = vmatpush1.bf16.msra.mxu0 0
      %738 = vmatprep.subr.bf16.mxu0 0
      %739 = vmatpush1.bf16.msra.mxu0 0
      %740 = vmatprep.subr.bf16.mxu0 0
      %741 = vmatpush1.bf16.msra.mxu0 0
      %742 = vmatprep.subr.bf16.mxu0 0
      %743 = vmatpush1.bf16.msra.mxu0 0
      %744 = vmatprep.subr.bf16.mxu0 0
      %745 = vmatpush1.bf16.msra.mxu0 0
      %746 = vmatprep.subr.bf16.mxu0 0
      %747 = vmatpush1.bf16.msra.mxu0 0
      %748 = vmatprep.subr.bf16.mxu0 0
      %749 = vmatpush1.bf16.msra.mxu0 0
      %750 = vmatprep.subr.bf16.mxu0 0
      %751 = vmatpush1.bf16.msra.mxu0 0
      %752 = vmatprep.subr.bf16.mxu0 0
      %753 = vmatpush1.bf16.msra.mxu0 0
      %754 = vmatprep.subr.bf16.mxu0 0
      %755 = vmatpush1.bf16.msra.mxu0 0
      %756 = vmatprep.subr.bf16.mxu0 0
      %757 = vmatpush1.bf16.msra.mxu0 0
      %758 = vmatprep.subr.bf16.mxu0 0
      %759 = vmatpush1.bf16.msra.mxu0 0
      %760 = vmatprep.subr.bf16.mxu0 0
      %761 = vmatpush1.bf16.msra.mxu0 0
      %762 = vmatprep.subr.bf16.mxu0 0
      %763 = vmatpush1.bf16.msra.mxu0 0
      %764 = vmatprep.subr.bf16.mxu0 0
      %765 = vmatpush1.bf16.msra.mxu0 0
      %766 = vmatprep.mubr.bf16.mxu0 0
      %767 = vmatmul.mubr.bf16.gmra.mrb[0].mxu0 %v684
      %v768 = vpop.f32.mrb[0].mxu0
      %v769 = vadd.f32 %v472, %v768
      %v770 = vpop.f32.mrb[0].mxu0
      %v771 = vpop.f32.mrb[0].mxu0
      %v772 = vadd.f32 %v475, %v771
      %v773 = vpop.f32.mrb[0].mxu0
      %774 = vmatprep.mubr.bf16.mxu0 0
      %775 = vmatmul.mubr.bf16.gmra.mrb[0].mxu0 %v687
      %v776 = vpop.f32.mrb[0].mxu0
      %v777 = vadd.f32 %v480, %v776
      %v778 = vpop.f32.mrb[0].mxu0
      %v779 = vpop.f32.mrb[0].mxu0
      %v780 = vadd.f32 %v483, %v779
      %v781 = vpop.f32.mrb[0].mxu0
      %782 = vmatprep.mubr.bf16.mxu0 0
      %783 = vmatmul.mubr.bf16.gmra.mrb[0].mxu0 %v690
      %v784 = vpop.f32.mrb[0].mxu0
      %v785 = vadd.f32 %v488, %v784
      %v786 = vpop.f32.mrb[0].mxu0
      %v787 = vpop.f32.mrb[0].mxu0
      %v788 = vadd.f32 %v491, %v787
      %v789 = vpop.f32.mrb[0].mxu0
      %790 = vmatprep.mubr.bf16.mxu0 0
      %791 = vmatmul.mubr.bf16.gmra.mrb[0].mxu0 %v693
      %v792 = vpop.f32.mrb[0].mxu0
      %v793 = vadd.f32 %v496, %v792
      %v794 = vpop.f32.mrb[0].mxu0
      %v795 = vpop.f32.mrb[0].mxu0
      %v796 = vadd.f32 %v499, %v795
      %v797 = vpop.f32.mrb[0].mxu0
      %798 = vmatprep.mubr.bf16.mxu0 0
      %799 = vmatmul.mubr.bf16.gmra.mrb[0].mxu0 %v696
      %v800 = vpop.f32.mrb[0].mxu0
      %v801 = vadd.f32 %v504, %v800
      %v802 = vpop.f32.mrb[0].mxu0
      %v803 = vpop.f32.mrb[0].mxu0
      %v804 = vadd.f32 %v507, %v803
      %v805 = vpop.f32.mrb[0].mxu0
      %806 = vmatprep.mubr.bf16.mxu0 0
      %807 = vmatmul.mubr.bf16.gmra.mrb[0].mxu0 %v699
      %v808 = vpop.f32.mrb[0].mxu0
      %v809 = vadd.f32 %v512, %v808
      %v810 = vpop.f32.mrb[0].mxu0
      %v811 = vpop.f32.mrb[0].mxu0
      %v812 = vadd.f32 %v515, %v811
      %v813 = vpop.f32.mrb[0].mxu0
      %814 = vmatprep.mubr.bf16.mxu0 0
      %815 = vmatmul.mubr.bf16.gmra.mrb[0].mxu0 %v702
      %v816 = vpop.f32.mrb[0].mxu0
      %v817 = vadd.f32 %v520, %v816
      %v818 = vpop.f32.mrb[0].mxu0
      %v819 = vpop.f32.mrb[0].mxu0
      %v820 = vadd.f32 %v523, %v819
      %v821 = vpop.f32.mrb[0].mxu0
      %822 = vmatprep.mubr.bf16.mxu0 0
      %823 = vmatmul.mubr.bf16.gmra.mrb[0].mxu0 %v705
      %v824 = vpop.f32.mrb[0].mxu0
      %v825 = vadd.f32 %v528, %v824
      %v826 = vpop.f32.mrb[0].mxu0
      %v827 = vpop.f32.mrb[0].mxu0
      %v828 = vadd.f32 %v531, %v827
      %v829 = vpop.f32.mrb[0].mxu0
      %830 = vmatprep.mubr.bf16.mxu0 0
      %831 = vmatmul.mubr.bf16.gmra.mrb[0].mxu0 %v708
      %v832 = vpop.f32.mrb[0].mxu0
      %v833 = vadd.f32 %v536, %v832
      %v834 = vpop.f32.mrb[0].mxu0
      %v835 = vpop.f32.mrb[0].mxu0
      %v836 = vadd.f32 %v539, %v835
      %v837 = vpop.f32.mrb[0].mxu0
      %838 = vmatprep.mubr.bf16.mxu0 0
      %839 = vmatmul.mubr.bf16.gmra.mrb[0].mxu0 %v711
      %v840 = vpop.f32.mrb[0].mxu0
      %v841 = vadd.f32 %v544, %v840
      %v842 = vpop.f32.mrb[0].mxu0
      %v843 = vpop.f32.mrb[0].mxu0
      %v844 = vadd.f32 %v547, %v843
      %v845 = vpop.f32.mrb[0].mxu0
      %846 = vmatprep.mubr.bf16.mxu0 0
      %847 = vmatmul.mubr.bf16.gmra.mrb[0].mxu0 %v714
      %v848 = vpop.f32.mrb[0].mxu0
      %v849 = vadd.f32 %v552, %v848
      %v850 = vpop.f32.mrb[0].mxu0
      %v851 = vpop.f32.mrb[0].mxu0
      %v852 = vadd.f32 %v555, %v851
      %v853 = vpop.f32.mrb[0].mxu0
      %854 = vmatprep.mubr.bf16.mxu0 0
      %855 = vmatmul.mubr.bf16.gmra.mrb[0].mxu0 %v717
      %v856 = vpop.f32.mrb[0].mxu0
      %v857 = vadd.f32 %v560, %v856
      %v858 = vpop.f32.mrb[0].mxu0
      %v859 = vpop.f32.mrb[0].mxu0
      %v860 = vadd.f32 %v563, %v859
      %v861 = vpop.f32.mrb[0].mxu0
      %862 = vmatprep.mubr.bf16.mxu0 0
      %863 = vmatmul.mubr.bf16.gmra.mrb[0].mxu0 %v720
      %v864 = vpop.f32.mrb[0].mxu0
      %v865 = vadd.f32 %v568, %v864
      %v866 = vpop.f32.mrb[0].mxu0
      %v867 = vpop.f32.mrb[0].mxu0
      %v868 = vadd.f32 %v571, %v867
      %v869 = vpop.f32.mrb[0].mxu0
      %870 = vmatprep.mubr.bf16.mxu0 0
      %871 = vmatmul.mubr.bf16.gmra.mrb[0].mxu0 %v723
      %v872 = vpop.f32.mrb[0].mxu0
      %v873 = vadd.f32 %v576, %v872
      %v874 = vpop.f32.mrb[0].mxu0
      %v875 = vpop.f32.mrb[0].mxu0
      %v876 = vadd.f32 %v579, %v875
      %v877 = vpop.f32.mrb[0].mxu0
      %878 = vmatprep.mubr.bf16.mxu0 0
      %879 = vmatmul.mubr.bf16.gmra.mrb[0].mxu0 %v726
      %v880 = vpop.f32.mrb[0].mxu0
      %v881 = vadd.f32 %v584, %v880
      %v882 = vpop.f32.mrb[0].mxu0
      %v883 = vpop.f32.mrb[0].mxu0
      %v884 = vadd.f32 %v587, %v883
      %v885 = vpop.f32.mrb[0].mxu0
      %886 = vmatprep.mubr.bf16.mxu0 0
      %887 = vmatmul.mubr.bf16.gmra.mrb[0].mxu0 %v729
      %v888 = vpop.f32.mrb[0].mxu0
      %v889 = vadd.f32 %v592, %v888
      %v890 = vpop.f32.mrb[0].mxu0
      %v891 = vpop.f32.mrb[0].mxu0
      %v892 = vadd.f32 %v595, %v891
      %v893 = vpop.f32.mrb[0].mxu0
      %894 = vdwg.mxu0
      %s895 = sadd.s32 %s222, 2
      %s896 = smul.u32 %s895, 2
      %s897 = smul.addr %s896, 4
      %s898 = scalar_lea.vmem %s210, %s897
      %v899 = vld [vmem:[%s898] sm:$0xf]
      %v900 = vld [vmem:[%s898 + $0x4] sm:$0xf]
      %v901 = vld [vmem:[%s898 + $0x8] sm:$0xf]
      %v902 = vld [vmem:[%s898 + $0xc] sm:$0xf]
      %v903 = vld [vmem:[%s898 + $0x10] sm:$0xf]
      %v904 = vld [vmem:[%s898 + $0x14] sm:$0xf]
      %v905 = vld [vmem:[%s898 + $0x18] sm:$0xf]
      %v906 = vld [vmem:[%s898 + $0x1c] sm:$0xf]
      %v907 = vld [vmem:[%s898 + $0x20] sm:$0xf]
      %v908 = vld [vmem:[%s898 + $0x24] sm:$0xf]
      %v909 = vld [vmem:[%s898 + $0x28] sm:$0xf]
      %v910 = vld [vmem:[%s898 + $0x2c] sm:$0xf]
      %v911 = vld [vmem:[%s898 + $0x30] sm:$0xf]
      %v912 = vld [vmem:[%s898 + $0x34] sm:$0xf]
      %v913 = vld [vmem:[%s898 + $0x38] sm:$0xf]
      %v914 = vld [vmem:[%s898 + $0x3c] sm:$0xf]
      %v915 = vld [vmem:[%s898 + $0x40] sm:$0xf]
      %v916 = vld [vmem:[%s898 + $0x44] sm:$0xf]
      %v917 = vld [vmem:[%s898 + $0x48] sm:$0xf]
      %v918 = vld [vmem:[%s898 + $0x4c] sm:$0xf]
      %v919 = vld [vmem:[%s898 + $0x50] sm:$0xf]
      %v920 = vld [vmem:[%s898 + $0x54] sm:$0xf]
      %v921 = vld [vmem:[%s898 + $0x58] sm:$0xf]
      %v922 = vld [vmem:[%s898 + $0x5c] sm:$0xf]
      %v923 = vld [vmem:[%s898 + $0x60] sm:$0xf]
      %v924 = vld [vmem:[%s898 + $0x64] sm:$0xf]
      %v925 = vld [vmem:[%s898 + $0x68] sm:$0xf]
      %v926 = vld [vmem:[%s898 + $0x6c] sm:$0xf]
      %v927 = vld [vmem:[%s898 + $0x70] sm:$0xf]
      %v928 = vld [vmem:[%s898 + $0x74] sm:$0xf]
      %v929 = vld [vmem:[%s898 + $0x78] sm:$0xf]
      %v930 = vld [vmem:[%s898 + $0x7c] sm:$0xf]
      %s931 = scalar_lea.vmem %s1, 16
      %v932 = vld [vmem:[%s931] sm:$0xf]
      %v933 = vld [vmem:[%s931 + $0x4] sm:$0x3]
      %v966 = vunpack.c.l.b16 %v899
      %v967 = vunpack.c.l.b16 %v900
      %v968 = vunpack.c.l.b16 %v901
      %v969 = vunpack.c.l.b16 %v902
      %v970 = vunpack.c.l.b16 %v903
      %v971 = vunpack.c.l.b16 %v904
      %v972 = vunpack.c.l.b16 %v905
      %v973 = vunpack.c.l.b16 %v906
      %v974 = vunpack.c.l.b16 %v907
      %v975 = vunpack.c.l.b16 %v908
      %v976 = vunpack.c.l.b16 %v909
      %v977 = vunpack.c.l.b16 %v910
      %v978 = vunpack.c.l.b16 %v911
      %v979 = vunpack.c.l.b16 %v912
      %v980 = vunpack.c.l.b16 %v913
      %v981 = vunpack.c.l.b16 %v914
      %v982 = vunpack.c.l.b16 %v915
      %v983 = vunpack.c.l.b16 %v916
      %v984 = vunpack.c.l.b16 %v917
      %v985 = vunpack.c.l.b16 %v918
      %v986 = vunpack.c.l.b16 %v919
      %v987 = vunpack.c.l.b16 %v920
      %v988 = vunpack.c.l.b16 %v921
      %v989 = vunpack.c.l.b16 %v922
      %v990 = vunpack.c.l.b16 %v923
      %v991 = vunpack.c.l.b16 %v924
      %v992 = vunpack.c.l.b16 %v925
      %v993 = vunpack.c.l.b16 %v926
      %v994 = vunpack.c.l.b16 %v927
      %v995 = vunpack.c.l.b16 %v928
      %v996 = vunpack.c.l.b16 %v929
      %v997 = vunpack.c.l.b16 %v930
      %v998 = vpack.c.b16 %v967, %v966
      %v999 = vpack.c.b16 %v969, %v968
      %v1000 = vpack.c.b16 %v971, %v970
      %v1001 = vpack.c.b16 %v973, %v972
      %v1002 = vpack.c.b16 %v975, %v974
      %v1003 = vpack.c.b16 %v977, %v976
      %v1004 = vpack.c.b16 %v979, %v978
      %v1005 = vpack.c.b16 %v981, %v980
      %v1006 = vpack.c.b16 %v983, %v982
      %v1007 = vpack.c.b16 %v985, %v984
      %v1008 = vpack.c.b16 %v987, %v986
      %v1009 = vpack.c.b16 %v989, %v988
      %v1010 = vpack.c.b16 %v991, %v990
      %v1011 = vpack.c.b16 %v993, %v992
      %v1012 = vpack.c.b16 %v995, %v994
      %v1013 = vpack.c.b16 %v997, %v996
      %v1016 = vunpack.c.l.b16 %v932
      %v1017 = vunpack.c.l.b16 %v933
      %v1018 = vpack.c.b16 %v1017, %v1016
      %v1020 = vsel %vm384, %v998, 0
      %v1023 = vsel %vm384, %v999, 0
      %v1026 = vsel %vm384, %v1000, 0
      %v1029 = vsel %vm384, %v1001, 0
      %v1032 = vsel %vm384, %v1002, 0
      %v1035 = vsel %vm384, %v1003, 0
      %v1038 = vsel %vm384, %v1004, 0
      %v1041 = vsel %vm384, %v1005, 0
      %v1044 = vsel %vm384, %v1006, 0
      %v1047 = vsel %vm384, %v1007, 0
      %v1050 = vsel %vm384, %v1008, 0
      %v1053 = vsel %vm384, %v1009, 0
      %v1056 = vsel %vm384, %v1010, 0
      %v1059 = vsel %vm384, %v1011, 0
      %v1062 = vsel %vm384, %v1012, 0
      %v1065 = vsel %vm384, %v1013, 0
      %v1068 = vsel %vm433, %v1018, 0
      %1070 = vmatprep.subr.bf16.mxu0 0
      %1071 = vmatpush1.bf16.msra.mxu0 %v1068
      %1072 = vmatprep.subr.bf16.mxu0 0
      %1073 = vmatpush1.bf16.msra.mxu0 0
      %1074 = vmatprep.subr.bf16.mxu0 0
      %1075 = vmatpush1.bf16.msra.mxu0 0
      %1076 = vmatprep.subr.bf16.mxu0 0
      %1077 = vmatpush1.bf16.msra.mxu0 0
      %1078 = vmatprep.subr.bf16.mxu0 0
      %1079 = vmatpush1.bf16.msra.mxu0 0
      %1080 = vmatprep.subr.bf16.mxu0 0
      %1081 = vmatpush1.bf16.msra.mxu0 0
      %1082 = vmatprep.subr.bf16.mxu0 0
      %1083 = vmatpush1.bf16.msra.mxu0 0
      %1084 = vmatprep.subr.bf16.mxu0 0
      %1085 = vmatpush1.bf16.msra.mxu0 0
      %1086 = vmatprep.subr.bf16.mxu0 0
      %1087 = vmatpush1.bf16.msra.mxu0 0
      %1088 = vmatprep.subr.bf16.mxu0 0
      %1089 = vmatpush1.bf16.msra.mxu0 0
      %1090 = vmatprep.subr.bf16.mxu0 0
      %1091 = vmatpush1.bf16.msra.mxu0 0
      %1092 = vmatprep.subr.bf16.mxu0 0
      %1093 = vmatpush1.bf16.msra.mxu0 0
      %1094 = vmatprep.subr.bf16.mxu0 0
      %1095 = vmatpush1.bf16.msra.mxu0 0
      %1096 = vmatprep.subr.bf16.mxu0 0
      %1097 = vmatpush1.bf16.msra.mxu0 0
      %1098 = vmatprep.subr.bf16.mxu0 0
      %1099 = vmatpush1.bf16.msra.mxu0 0
      %1100 = vmatprep.subr.bf16.mxu0 0
      %1101 = vmatpush1.bf16.msra.mxu0 0
      %1102 = vmatprep.mubr.bf16.mxu0 0
      %1103 = vmatmul.mubr.bf16.gmra.mrb[0].mxu0 %v1020
      %v1104 = vpop.f32.mrb[0].mxu0
      %v1105 = vadd.f32 0.0, %v1104
      %v1106 = vpop.f32.mrb[0].mxu0
      %v1107 = vpop.f32.mrb[0].mxu0
      %v1108 = vadd.f32 0.0, %v1107
      %v1109 = vpop.f32.mrb[0].mxu0
      %1110 = vmatprep.mubr.bf16.mxu0 0
      %1111 = vmatmul.mubr.bf16.gmra.mrb[0].mxu0 %v1023
      %v1112 = vpop.f32.mrb[0].mxu0
      %v1113 = vadd.f32 0.0, %v1112
      %v1114 = vpop.f32.mrb[0].mxu0
      %v1115 = vpop.f32.mrb[0].mxu0
      %v1116 = vadd.f32 0.0, %v1115
      %v1117 = vpop.f32.mrb[0].mxu0
      %1118 = vmatprep.mubr.bf16.mxu0 0
      %1119 = vmatmul.mubr.bf16.gmra.mrb[0].mxu0 %v1026
      %v1120 = vpop.f32.mrb[0].mxu0
      %v1121 = vadd.f32 0.0, %v1120
      %v1122 = vpop.f32.mrb[0].mxu0
      %v1123 = vpop.f32.mrb[0].mxu0
      %v1124 = vadd.f32 0.0, %v1123
      %v1125 = vpop.f32.mrb[0].mxu0
      %1126 = vmatprep.mubr.bf16.mxu0 0
      %1127 = vmatmul.mubr.bf16.gmra.mrb[0].mxu0 %v1029
      %v1128 = vpop.f32.mrb[0].mxu0
      %v1129 = vadd.f32 0.0, %v1128
      %v1130 = vpop.f32.mrb[0].mxu0
      %v1131 = vpop.f32.mrb[0].mxu0
      %v1132 = vadd.f32 0.0, %v1131
      %v1133 = vpop.f32.mrb[0].mxu0
      %1134 = vmatprep.mubr.bf16.mxu0 0
      %1135 = vmatmul.mubr.bf16.gmra.mrb[0].mxu0 %v1032
      %v1136 = vpop.f32.mrb[0].mxu0
      %v1137 = vadd.f32 0.0, %v1136
      %v1138 = vpop.f32.mrb[0].mxu0
      %v1139 = vpop.f32.mrb[0].mxu0
      %v1140 = vadd.f32 0.0, %v1139
      %v1141 = vpop.f32.mrb[0].mxu0
      %1142 = vmatprep.mubr.bf16.mxu0 0
      %1143 = vmatmul.mubr.bf16.gmra.mrb[0].mxu0 %v1035
      %v1144 = vpop.f32.mrb[0].mxu0
      %v1145 = vadd.f32 0.0, %v1144
      %v1146 = vpop.f32.mrb[0].mxu0
      %v1147 = vpop.f32.mrb[0].mxu0
      %v1148 = vadd.f32 0.0, %v1147
      %v1149 = vpop.f32.mrb[0].mxu0
      %1150 = vmatprep.mubr.bf16.mxu0 0
      %1151 = vmatmul.mubr.bf16.gmra.mrb[0].mxu0 %v1038
      %v1152 = vpop.f32.mrb[0].mxu0
      %v1153 = vadd.f32 0.0, %v1152
      %v1154 = vpop.f32.mrb[0].mxu0
      %v1155 = vpop.f32.mrb[0].mxu0
      %v1156 = vadd.f32 0.0, %v1155
      %v1157 = vpop.f32.mrb[0].mxu0
      %1158 = vmatprep.mubr.bf16.mxu0 0
      %1159 = vmatmul.mubr.bf16.gmra.mrb[0].mxu0 %v1041
      %v1160 = vpop.f32.mrb[0].mxu0
      %v1161 = vadd.f32 0.0, %v1160
      %v1162 = vpop.f32.mrb[0].mxu0
      %v1163 = vpop.f32.mrb[0].mxu0
      %v1164 = vadd.f32 0.0, %v1163
      %v1165 = vpop.f32.mrb[0].mxu0
      %1166 = vmatprep.mubr.bf16.mxu0 0
      %1167 = vmatmul.mubr.bf16.gmra.mrb[0].mxu0 %v1044
      %v1168 = vpop.f32.mrb[0].mxu0
      %v1169 = vadd.f32 0.0, %v1168
      %v1170 = vpop.f32.mrb[0].mxu0
      %v1171 = vpop.f32.mrb[0].mxu0
      %v1172 = vadd.f32 0.0, %v1171
      %v1173 = vpop.f32.mrb[0].mxu0
      %1174 = vmatprep.mubr.bf16.mxu0 0
      %1175 = vmatmul.mubr.bf16.gmra.mrb[0].mxu0 %v1047
      %v1176 = vpop.f32.mrb[0].mxu0
      %v1177 = vadd.f32 0.0, %v1176
      %v1178 = vpop.f32.mrb[0].mxu0
      %v1179 = vpop.f32.mrb[0].mxu0
      %v1180 = vadd.f32 0.0, %v1179
      %v1181 = vpop.f32.mrb[0].mxu0
      %1182 = vmatprep.mubr.bf16.mxu0 0
      %1183 = vmatmul.mubr.bf16.gmra.mrb[0].mxu0 %v1050
      %v1184 = vpop.f32.mrb[0].mxu0
      %v1185 = vadd.f32 0.0, %v1184
      %v1186 = vpop.f32.mrb[0].mxu0
      %v1187 = vpop.f32.mrb[0].mxu0
      %v1188 = vadd.f32 0.0, %v1187
      %v1189 = vpop.f32.mrb[0].mxu0
      %1190 = vmatprep.mubr.bf16.mxu0 0
      %1191 = vmatmul.mubr.bf16.gmra.mrb[0].mxu0 %v1053
      %v1192 = vpop.f32.mrb[0].mxu0
      %v1193 = vadd.f32 0.0, %v1192
      %v1194 = vpop.f32.mrb[0].mxu0
      %v1195 = vpop.f32.mrb[0].mxu0
      %v1196 = vadd.f32 0.0, %v1195
      %v1197 = vpop.f32.mrb[0].mxu0
      %1198 = vmatprep.mubr.bf16.mxu0 0
      %1199 = vmatmul.mubr.bf16.gmra.mrb[0].mxu0 %v1056
      %v1200 = vpop.f32.mrb[0].mxu0
      %v1201 = vadd.f32 0.0, %v1200
      %v1202 = vpop.f32.mrb[0].mxu0
      %v1203 = vpop.f32.mrb[0].mxu0
      %v1204 = vadd.f32 0.0, %v1203
      %v1205 = vpop.f32.mrb[0].mxu0
      %1206 = vmatprep.mubr.bf16.mxu0 0
      %1207 = vmatmul.mubr.bf16.gmra.mrb[0].mxu0 %v1059
      %v1208 = vpop.f32.mrb[0].mxu0
      %v1209 = vadd.f32 0.0, %v1208
      %v1210 = vpop.f32.mrb[0].mxu0
      %v1211 = vpop.f32.mrb[0].mxu0
      %v1212 = vadd.f32 0.0, %v1211
      %v1213 = vpop.f32.mrb[0].mxu0
      %1214 = vmatprep.mubr.bf16.mxu0 0
      %1215 = vmatmul.mubr.bf16.gmra.mrb[0].mxu0 %v1062
      %v1216 = vpop.f32.mrb[0].mxu0
      %v1217 = vadd.f32 0.0, %v1216
      %v1218 = vpop.f32.mrb[0].mxu0
      %v1219 = vpop.f32.mrb[0].mxu0
      %v1220 = vadd.f32 0.0, %v1219
      %v1221 = vpop.f32.mrb[0].mxu0
      %1222 = vmatprep.mubr.bf16.mxu0 0
      %1223 = vmatmul.mubr.bf16.gmra.mrb[0].mxu0 %v1065
      %v1224 = vpop.f32.mrb[0].mxu0
      %v1225 = vadd.f32 0.0, %v1224
      %v1226 = vpop.f32.mrb[0].mxu0
      %v1227 = vpop.f32.mrb[0].mxu0
      %v1228 = vadd.f32 0.0, %v1227
      %v1229 = vpop.f32.mrb[0].mxu0
      %1230 = vdwg.mxu0
      %v1231 = vadd.f32 %v769, %v1105
      %v1232 = vadd.f32 %v772, %v1108
      %v1233 = vadd.f32 %v777, %v1113
      %v1234 = vadd.f32 %v780, %v1116
      %v1235 = vadd.f32 %v785, %v1121
      %v1236 = vadd.f32 %v788, %v1124
      %v1237 = vadd.f32 %v793, %v1129
      %v1238 = vadd.f32 %v796, %v1132
      %v1239 = vadd.f32 %v801, %v1137
      %v1240 = vadd.f32 %v804, %v1140
      %v1241 = vadd.f32 %v809, %v1145
      %v1242 = vadd.f32 %v812, %v1148
      %v1243 = vadd.f32 %v817, %v1153
      %v1244 = vadd.f32 %v820, %v1156
      %v1245 = vadd.f32 %v825, %v1161
      %v1246 = vadd.f32 %v828, %v1164
      %v1247 = vadd.f32 %v833, %v1169
      %v1248 = vadd.f32 %v836, %v1172
      %v1249 = vadd.f32 %v841, %v1177
      %v1250 = vadd.f32 %v844, %v1180
      %v1251 = vadd.f32 %v849, %v1185
      %v1252 = vadd.f32 %v852, %v1188
      %v1253 = vadd.f32 %v857, %v1193
      %v1254 = vadd.f32 %v860, %v1196
      %v1255 = vadd.f32 %v865, %v1201
      %v1256 = vadd.f32 %v868, %v1204
      %v1257 = vadd.f32 %v873, %v1209
      %v1258 = vadd.f32 %v876, %v1212
      %v1259 = vadd.f32 %v881, %v1217
      %v1260 = vadd.f32 %v884, %v1220
      %v1261 = vadd.f32 %v889, %v1225
      %v1262 = vadd.f32 %v892, %v1228
      %v1263 = vld [vmem:[%s2] sm:$0x1]
      %v1265 = vlaneseq
      %v1266 = vshrl.u32 %v1265, 7
      %v1267 = vsub.s32 0, %v1266
      %v1268 = vrot.slane %v1263, %v1267
      %v1270 = vmul.f32 %v1231, %v1268
      %v1271 = vmul.f32 %v1232, %v1268
      %v1272 = vmul.f32 %v1233, %v1268
      %v1273 = vmul.f32 %v1234, %v1268
      %v1274 = vmul.f32 %v1235, %v1268
      %v1275 = vmul.f32 %v1236, %v1268
      %v1276 = vmul.f32 %v1237, %v1268
      %v1277 = vmul.f32 %v1238, %v1268
      %v1278 = vmul.f32 %v1239, %v1268
      %v1279 = vmul.f32 %v1240, %v1268
      %v1280 = vmul.f32 %v1241, %v1268
      %v1281 = vmul.f32 %v1242, %v1268
      %v1282 = vmul.f32 %v1243, %v1268
      %v1283 = vmul.f32 %v1244, %v1268
      %v1284 = vmul.f32 %v1245, %v1268
      %v1285 = vmul.f32 %v1246, %v1268
      %v1286 = vmul.f32 %v1247, %v1268
      %v1287 = vmul.f32 %v1248, %v1268
      %v1288 = vmul.f32 %v1249, %v1268
      %v1289 = vmul.f32 %v1250, %v1268
      %v1290 = vmul.f32 %v1251, %v1268
      %v1291 = vmul.f32 %v1252, %v1268
      %v1292 = vmul.f32 %v1253, %v1268
      %v1293 = vmul.f32 %v1254, %v1268
      %v1294 = vmul.f32 %v1255, %v1268
      %v1295 = vmul.f32 %v1256, %v1268
      %v1296 = vmul.f32 %v1257, %v1268
      %v1297 = vmul.f32 %v1258, %v1268
      %v1298 = vmul.f32 %v1259, %v1268
      %v1299 = vmul.f32 %v1260, %v1268
      %v1300 = vmul.f32 %v1261, %v1268
      %v1301 = vmul.f32 %v1262, %v1268
      %v1302 = vld [vmem:[%s3] sm:$0x1]
      %v1304 = vlaneseq
      %v1305 = vshrl.u32 %v1304, 7
      %v1306 = vsub.s32 0, %v1305
      %v1307 = vrot.slane %v1302, %v1306
      %v1309 = vadd.f32 %v1270, %v1307
      %v1310 = vadd.f32 %v1271, %v1307
      %v1311 = vadd.f32 %v1272, %v1307
      %v1312 = vadd.f32 %v1273, %v1307
      %v1313 = vadd.f32 %v1274, %v1307
      %v1314 = vadd.f32 %v1275, %v1307
      %v1315 = vadd.f32 %v1276, %v1307
      %v1316 = vadd.f32 %v1277, %v1307
      %v1317 = vadd.f32 %v1278, %v1307
      %v1318 = vadd.f32 %v1279, %v1307
      %v1319 = vadd.f32 %v1280, %v1307
      %v1320 = vadd.f32 %v1281, %v1307
      %v1321 = vadd.f32 %v1282, %v1307
      %v1322 = vadd.f32 %v1283, %v1307
      %v1323 = vadd.f32 %v1284, %v1307
      %v1324 = vadd.f32 %v1285, %v1307
      %v1325 = vadd.f32 %v1286, %v1307
      %v1326 = vadd.f32 %v1287, %v1307
      %v1327 = vadd.f32 %v1288, %v1307
      %v1328 = vadd.f32 %v1289, %v1307
      %v1329 = vadd.f32 %v1290, %v1307
      %v1330 = vadd.f32 %v1291, %v1307
      %v1331 = vadd.f32 %v1292, %v1307
      %v1332 = vadd.f32 %v1293, %v1307
      %v1333 = vadd.f32 %v1294, %v1307
      %v1334 = vadd.f32 %v1295, %v1307
      %v1335 = vadd.f32 %v1296, %v1307
      %v1336 = vadd.f32 %v1297, %v1307
      %v1337 = vadd.f32 %v1298, %v1307
      %v1338 = vadd.f32 %v1299, %v1307
      %v1339 = vadd.f32 %v1300, %v1307
      %v1340 = vadd.f32 %v1301, %v1307
      %v1341 = vmax.f32 %v1309, 0.0
      %v1342 = vmax.f32 %v1310, 0.0
      %v1343 = vmax.f32 %v1311, 0.0
      %v1344 = vmax.f32 %v1312, 0.0
      %v1345 = vmax.f32 %v1313, 0.0
      %v1346 = vmax.f32 %v1314, 0.0
      %v1347 = vmax.f32 %v1315, 0.0
      %v1348 = vmax.f32 %v1316, 0.0
      %v1349 = vmax.f32 %v1317, 0.0
      %v1350 = vmax.f32 %v1318, 0.0
      %v1351 = vmax.f32 %v1319, 0.0
      %v1352 = vmax.f32 %v1320, 0.0
      %v1353 = vmax.f32 %v1321, 0.0
      %v1354 = vmax.f32 %v1322, 0.0
      %v1355 = vmax.f32 %v1323, 0.0
      %v1356 = vmax.f32 %v1324, 0.0
      %v1357 = vmax.f32 %v1325, 0.0
      %v1358 = vmax.f32 %v1326, 0.0
      %v1359 = vmax.f32 %v1327, 0.0
      %v1360 = vmax.f32 %v1328, 0.0
      %v1361 = vmax.f32 %v1329, 0.0
      %v1362 = vmax.f32 %v1330, 0.0
      %v1363 = vmax.f32 %v1331, 0.0
      %v1364 = vmax.f32 %v1332, 0.0
      %v1365 = vmax.f32 %v1333, 0.0
      %v1366 = vmax.f32 %v1334, 0.0
      %v1367 = vmax.f32 %v1335, 0.0
      %v1368 = vmax.f32 %v1336, 0.0
      %v1369 = vmax.f32 %v1337, 0.0
      %v1370 = vmax.f32 %v1338, 0.0
      %v1371 = vmax.f32 %v1339, 0.0
      %v1372 = vmax.f32 %v1340, 0.0
      %vm1373 = vcmask 64512
      %1374 = vst.msk [vmem:[%s219] sm:$0xff] %vm1373, %v1341
      %1375 = vst.msk [vmem:[%s219 + $0x8] sm:$0xff] %vm1373, %v1342
      %1376 = vst.msk [vmem:[%s219 + $0x10] sm:$0xff] %vm1373, %v1343
      %1377 = vst.msk [vmem:[%s219 + $0x18] sm:$0xff] %vm1373, %v1344
      %1378 = vst.msk [vmem:[%s219 + $0x20] sm:$0xff] %vm1373, %v1345
      %1379 = vst.msk [vmem:[%s219 + $0x28] sm:$0xff] %vm1373, %v1346
      %1380 = vst.msk [vmem:[%s219 + $0x30] sm:$0xff] %vm1373, %v1347
      %1381 = vst.msk [vmem:[%s219 + $0x38] sm:$0xff] %vm1373, %v1348
      %1382 = vst.msk [vmem:[%s219 + $0x40] sm:$0xff] %vm1373, %v1349
      %1383 = vst.msk [vmem:[%s219 + $0x48] sm:$0xff] %vm1373, %v1350
      %1384 = vst.msk [vmem:[%s219 + $0x50] sm:$0xff] %vm1373, %v1351
      %1385 = vst.msk [vmem:[%s219 + $0x58] sm:$0xff] %vm1373, %v1352
      %1386 = vst.msk [vmem:[%s219 + $0x60] sm:$0xff] %vm1373, %v1353
      %1387 = vst.msk [vmem:[%s219 + $0x68] sm:$0xff] %vm1373, %v1354
      %1388 = vst.msk [vmem:[%s219 + $0x70] sm:$0xff] %vm1373, %v1355
      %1389 = vst.msk [vmem:[%s219 + $0x78] sm:$0xff] %vm1373, %v1356
      %1390 = vst.msk [vmem:[%s219 + $0x80] sm:$0xff] %vm1373, %v1357
      %1391 = vst.msk [vmem:[%s219 + $0x88] sm:$0xff] %vm1373, %v1358
      %1392 = vst.msk [vmem:[%s219 + $0x90] sm:$0xff] %vm1373, %v1359
      %1393 = vst.msk [vmem:[%s219 + $0x98] sm:$0xff] %vm1373, %v1360
      %1394 = vst.msk [vmem:[%s219 + $0xa0] sm:$0xff] %vm1373, %v1361
      %1395 = vst.msk [vmem:[%s219 + $0xa8] sm:$0xff] %vm1373, %v1362
      %1396 = vst.msk [vmem:[%s219 + $0xb0] sm:$0xff] %vm1373, %v1363
      %1397 = vst.msk [vmem:[%s219 + $0xb8] sm:$0xff] %vm1373, %v1364
      %1398 = vst.msk [vmem:[%s219 + $0xc0] sm:$0xff] %vm1373, %v1365
      %1399 = vst.msk [vmem:[%s219 + $0xc8] sm:$0xff] %vm1373, %v1366
      %1400 = vst.msk [vmem:[%s219 + $0xd0] sm:$0xff] %vm1373, %v1367
      %1401 = vst.msk [vmem:[%s219 + $0xd8] sm:$0xff] %vm1373, %v1368
      %1402 = vst.msk [vmem:[%s219 + $0xe0] sm:$0xff] %vm1373, %v1369
      %1403 = vst.msk [vmem:[%s219 + $0xe8] sm:$0xff] %vm1373, %v1370
      %1404 = vst.msk [vmem:[%s219 + $0xf0] sm:$0xff] %vm1373, %v1371
      %1405 = vst.msk [vmem:[%s219 + $0xf8] sm:$0xff] %vm1373, %v1372
      %s1406 = smul.u32 32, %s20
      %p1407 = scmp.lt.s32.totalorder %s19, 1
      %s1408 = scalar_select %p1407, %s19, 1
      %p1409 = scmp.lt.s32.totalorder %s1406, 31
      %s1410 = scalar_select %p1409, %s1406, 31
      %s1411 = smul.addr %s1408, 32
      %s1412 = sadd.s32 %s1410, %s1411
      %s1413 = smul.addr %s1412, 8
      %s1414 = scalar_lea.vmem %s4, %s1413
      // Predicated region
      $region37: #{tpu_custom_call.1} parent=35 // pred_check
        %p1415 = pneg %p136
      $region38: #{tpu_custom_call.1} parent=35 // pred_check_branch
        %1417 = sbr.rel (%p1415) target = $region40
      $region39: #{tpu_custom_call.1} parent=35 // pred_region
        %s1418 = smul.u32 32, %s20
      $region40: #{tpu_custom_call.1} parent=35 // pred_fallthru
        _
    $region36: #{tpu_custom_call.1} parent=5 // pred_fallthru
      _
    %p1419 = scmp.le.s32.totalorder 2, %s10
    // Predicated region
    $region41: #{tpu_custom_call.1} parent=5 // pred_check
      %p1420 = pneg %p1419
    $region42: #{tpu_custom_call.1} parent=5 // pred_check_branch
      %1422 = sbr.rel (%p1420) target = $region44
    $region43: #{tpu_custom_call.1} parent=5 // pred_region
      %s1423 = ssub.s32 %s10, 2
      // Predicated region
      $region45: #{tpu_custom_call.1} parent=43 // pred_check
        %p1424 = pneg %p142
      $region46: #{tpu_custom_call.1} parent=43 // pred_check_branch
        %1426 = sbr.rel (%p1424) target = $region48
      $region47: #{tpu_custom_call.1} parent=43 // pred_region
        %s1427 = smul.u32 32, %s22
        %p1428 = scmp.lt.s32.totalorder %s21, 1
        %s1429 = scalar_select %p1428, %s21, 1
        %p1430 = scmp.lt.s32.totalorder %s1427, 31
        %s1431 = scalar_select %p1430, %s1427, 31
        %s1432 = smul.addr %s1429, 32
        %s1433 = sadd.s32 %s1431, %s1432
        %s1434 = smul.addr %s1433, 8
        %s1435 = scalar_lea.vmem %s4, %s1434
      $region48: #{tpu_custom_call.1} parent=43 // pred_fallthru
        _
    $region44: #{tpu_custom_call.1} parent=5 // pred_fallthru
      _
  $region6: #{tpu_custom_call.1} parent=0 // loop_footer
    %s14 = sadd.s32 1, %s10
  $region7: #{tpu_custom_call.1} parent=0 // loop_footer_branch
    %9 = sbr.rel target = $region3
  $region8: #{tpu_custom_call.1} parent=0 // loop_exit
    _

</llo_original>
